<compile_context>
chip_gen: v7x
topology: tpu7x:2x2x1
jax: 0.10.0
libtpu: 0.0.40
codegen_flags: <defaults>
</compile_context>

<pallas_src>
import functools

import jax
import jax.numpy as jnp
from jax.experimental import pallas as pl
from jax.experimental.pallas import tpu as pltpu


def _round_up(x, m):
    return (x + m - 1) // m * m


def _pick_tile(n, cap, unit):
    """Tile size that is a multiple of `unit` or exactly the (small) array dim."""
    if n <= cap:
        if n < unit or n % unit == 0:
            return n
        return _round_up(n, unit)
    return cap


# ----------------------------------------------------------------------------
# Kernel: one (row-tile, reduction-tile) step of  out = S @ H + b
# ----------------------------------------------------------------------------
def _sh_kernel(s_ref, h_ref, b_ref, o_ref, acc_ref, *, n_valid, tk, mask_cols):
    k = pl.program_id(1)

    @pl.when(k == 0)
    def _init():
        acc_ref[...] = jnp.zeros_like(acc_ref)

    s = s_ref[...]
    if mask_cols:
        # Trailing reduction block: columns >= N are out-of-bounds reads with
        # undefined contents; zero them before they reach the MXU.
        col = k * tk + jax.lax.broadcasted_iota(jnp.int32, s.shape, 1)
        s = jnp.where(col < n_valid, s, 0.0)
    s = s.astype(jnp.bfloat16)

    # H is fully resident in VMEM; slice the TK rows matching this reduction step.
    start = pl.multiple_of(k * tk, tk)
    h = h_ref[pl.ds(start, tk), :]

    acc_ref[...] += jnp.dot(s, h, preferred_element_type=jnp.float32)

    @pl.when(k == pl.num_programs(1) - 1)
    def _finalize():
        o_ref[...] = (acc_ref[...] + b_ref[...]).astype(o_ref.dtype)


def gcnn_layer(S, x, W, b, *, tm_cap=512, tk_cap=2048):
    """out = S @ x @ W + b[None, :]  (forward of standard_gcnn_layer)."""
    N, in_dim = x.shape
    out_dim = W.shape[1]
    LANES, SUB = 128, 8

    S = S.astype(jnp.float32)

    # Tile sizes capped to the problem so tiny graphs are not padded to huge tiles.
    tm = _pick_tile(N, tm_cap, SUB)
    tk = _pick_tile(N, tk_cap, LANES)
    out_pad = _round_up(out_dim, LANES)   # lane-dense output / accumulator
    kp = _round_up(N, tk)                 # H rows padded so in-kernel pl.ds stays in bounds

    # Tiny matmul H = x @ W done with a single XLA dot (no extra kernel launch or
    # HBM copies); kept resident in VMEM for the big kernel as zero-padded bf16.
    H = jnp.dot(x.astype(jnp.float32), W.astype(jnp.float32),
                preferred_element_type=jnp.float32)
    H_p = jnp.zeros((kp, out_pad), jnp.bfloat16).at[:N, :out_dim].set(
        H.astype(jnp.bfloat16))
    b_p = jnp.zeros((1, out_pad), jnp.float32).at[0, :out_dim].set(
        b.astype(jnp.float32))

    grid = (pl.cdiv(N, tm), kp // tk)
    kernel = functools.partial(_sh_kernel, n_valid=N, tk=tk,
                               mask_cols=(N % tk) != 0)

    # TODO(synk): on v7x, optionally feed an fp8(e4m3) S operand (MXU-supported there)
    # to halve the dominant HBM stream, gated behind an accuracy check.
    out = pl.pallas_call(
        kernel,
        out_shape=jax.ShapeDtypeStruct((N, out_pad), jnp.float32),
        grid=grid,
        in_specs=[
            # S streamed straight from its original f32 HBM layout, tile (tm, tk).
            pl.BlockSpec((tm, tk), lambda i, k: (i, k)),
            # H fully resident: constant-index full block, DMA'd exactly once.
            pl.BlockSpec((kp, out_pad), lambda i, k: (0, 0)),
            pl.BlockSpec((1, out_pad), lambda i, k: (0, 0)),
        ],
        out_specs=pl.BlockSpec((tm, out_pad), lambda i, k: (i, 0)),
        scratch_shapes=[pltpu.VMEM((tm, out_pad), jnp.float32)],
        compiler_params=pltpu.CompilerParams(
            dimension_semantics=("parallel", "arbitrary"),
            vmem_limit_bytes=32 * 1024 * 1024,
        ),
        cost_estimate=pl.CostEstimate(
            flops=2 * N * N * out_pad,
            transcendentals=0,
            bytes_accessed=N * N * 4 + kp * out_pad * 2 + N * out_pad * 4 + out_pad * 4,
        ),
    )(S, H_p, b_p)

    return out[:, :out_dim].astype(x.dtype)


def build_params(key, n_nodes, in_dim, out_dim):
    """Deterministic synthetic parameters mirroring standard_gcnn_layer.__init__."""
    k_adj, k_w, k_b = jax.random.split(key, 3)

    # random symmetric binary adjacency (no self loops)
    a = jax.random.bernoulli(k_adj, p=0.3, shape=(n_nodes, n_nodes)).astype(jnp.float32)
    a = jnp.triu(a, k=1)
    S = a + a.T

    # normalization: S <- D^{-1/2} (S + I) D^{-1/2}
    S = S + jnp.eye(n_nodes, dtype=jnp.float32)
    d = S.sum(axis=1)
    D_inv = jnp.diag(1.0 / jnp.sqrt(d))
    S = D_inv @ S @ D_inv

    # W: kaiming_uniform_ style (fan_in = out_dim for an (in_dim, out_dim) tensor)
    bound_w = jnp.sqrt(6.0 / out_dim)
    W = jax.random.uniform(k_w, (in_dim, out_dim), jnp.float32, -bound_w, bound_w)

    # b: uniform(-std, std), std = 1 / (in_dim * out_dim)
    std = 1.0 / (in_dim * out_dim)
    b = jax.random.uniform(k_b, (out_dim,), jnp.float32, -std, std)

    return S, W, b


if __name__ == "__main__":
    key = jax.random.PRNGKey(0)
    n_nodes, in_dim, out_dim = 16, 32, 16

    k_params, k_x = jax.random.split(key)
    S, W, b = build_params(k_params, n_nodes, in_dim, out_dim)
    x = jax.random.normal(k_x, (n_nodes, in_dim), jnp.float32)

    out = jax.jit(gcnn_layer)(S, x, W, b)
    out = jax.block_until_ready(out)

    # f32 reference; kernel uses bf16 MXU operands with f32 accumulation,
    # so compare with bf16-appropriate tolerance.
    ref = S @ x @ W + b[None, :]
    assert out.shape == (n_nodes, out_dim)
    assert jnp.allclose(out, ref, atol=2e-2, rtol=2e-2), "mismatch vs JAX reference"
    print("KERNEL_OK")
</pallas_src>

<mosaic_0001>
module attributes {stable_mosaic.version = 11 : i64} {
  func.func @_sh_kernel(%arg0: i32, %arg1: i32, %arg2: memref<16x16xf32, #tpu.memory_space<vmem>>, %arg3: memref<16x128xbf16, #tpu.memory_space<vmem>>, %arg4: memref<1x128xf32, #tpu.memory_space<vmem>>, %arg5: memref<16x128xf32, #tpu.memory_space<vmem>>, %arg6: memref<16x128xf32, #tpu.memory_space<vmem>>) attributes {dimension_semantics = [#tpu.dimension_semantics<parallel>, #tpu.dimension_semantics<arbitrary>], iteration_bounds = array<i64: 1, 1>, scalar_prefetch = 0 : i64, scratch_operands = 1 : i64, tpu.core_type = #tpu.core_type<tc>, window_params = [{transform_indices = @transform_0, window_bounds = array<i64: 16, 16>}, {pipeline_mode = #tpu.pipeline_mode<synchronous>, transform_indices = @transform_1, window_bounds = array<i64: 16, 128>}, {pipeline_mode = #tpu.pipeline_mode<synchronous>, transform_indices = @transform_2, window_bounds = array<i64: 1, 128>}, {transform_indices = @transform_3, window_bounds = array<i64: 16, 128>}]} {
    %c0_i32 = arith.constant 0 : i32
    %0 = arith.cmpi eq, %arg1, %c0_i32 : i32
    %1 = arith.extui %0 : i1 to i32
    %c0_i32_0 = arith.constant 0 : i32
    %2 = arith.cmpi ne, %1, %c0_i32_0 : i32
    scf.if %2 {
      %cst_9 = arith.constant 0.000000e+00 : f32
      %16 = vector.broadcast %cst_9 : f32 to vector<16x128xf32>
      %c0_10 = arith.constant 0 : index
      %c0_11 = arith.constant 0 : index
      %17 = vector.load %arg6[%c0_10, %c0_11] : memref<16x128xf32, #tpu.memory_space<vmem>>, vector<16x128xf32>
      tpu.vector_store %arg6[%c0_10, %c0_11], %16 {strides = array<i32>} : memref<16x128xf32, #tpu.memory_space<vmem>>, vector<16x128xf32>,
    } else {
    }
    %c0 = arith.constant 0 : index
    %c0_1 = arith.constant 0 : index
    %3 = vector.load %arg2[%c0, %c0_1] : memref<16x16xf32, #tpu.memory_space<vmem>>, vector<16x16xf32>
    %4 = arith.truncf %3 : vector<16x16xf32> to vector<16x16xbf16>
    %c16_i32 = arith.constant 16 : i32
    %5 = arith.muli %arg1, %c16_i32 : i32
    %6 = tpu.assume_multiple %5, 16 : i32
    %7 = arith.index_cast %6 : i32 to index
    %c0_2 = arith.constant 0 : index
    %8 = vector.load %arg3[%7, %c0_2] : memref<16x128xbf16, #tpu.memory_space<vmem>>, vector<16x128xbf16>
    %c0_3 = arith.constant 0 : index
    %c0_4 = arith.constant 0 : index
    %9 = vector.load %arg6[%c0_3, %c0_4] : memref<16x128xf32, #tpu.memory_space<vmem>>, vector<16x128xf32>
    %cst = arith.constant dense<0.000000e+00> : vector<16x128xf32>
    %10 = tpu.matmul %4, %8, %cst {dimension_numbers = #tpu.dot_dimension_numbers<[1], [0], [0], [1], [0, 0, 1, 1], [], []>} : vector<16x16xbf16>, vector<16x128xbf16>, vector<16x128xf32> -> vector<16x128xf32>
    %11 = arith.addf %9, %10 : vector<16x128xf32>
    %c0_5 = arith.constant 0 : index
    %c0_6 = arith.constant 0 : index
    %12 = vector.load %arg6[%c0_5, %c0_6] : memref<16x128xf32, #tpu.memory_space<vmem>>, vector<16x128xf32>
    tpu.vector_store %arg6[%c0_5, %c0_6], %11 {strides = array<i32>} : memref<16x128xf32, #tpu.memory_space<vmem>>, vector<16x128xf32>,
    %c0_i32_7 = arith.constant 0 : i32
    %13 = arith.cmpi eq, %arg1, %c0_i32_7 : i32
    %14 = arith.extui %13 : i1 to i32
    %c0_i32_8 = arith.constant 0 : i32
    %15 = arith.cmpi ne, %14, %c0_i32_8 : i32
    scf.if %15 {
      %c0_9 = arith.constant 0 : index
      %c0_10 = arith.constant 0 : index
      %16 = vector.load %arg6[%c0_9, %c0_10] : memref<16x128xf32, #tpu.memory_space<vmem>>, vector<16x128xf32>
      %c0_11 = arith.constant 0 : index
      %c0_12 = arith.constant 0 : index
      %17 = vector.load %arg4[%c0_11, %c0_12] : memref<1x128xf32, #tpu.memory_space<vmem>>, vector<1x128xf32>
      %18 = vector.broadcast %17 : vector<1x128xf32> to vector<16x128xf32>
      %19 = arith.addf %16, %18 : vector<16x128xf32>
      %c0_13 = arith.constant 0 : index
      %c0_14 = arith.constant 0 : index
      %20 = vector.load %arg5[%c0_13, %c0_14] : memref<16x128xf32, #tpu.memory_space<vmem>>, vector<16x128xf32>
      tpu.vector_store %arg5[%c0_13, %c0_14], %19 {strides = array<i32>} : memref<16x128xf32, #tpu.memory_space<vmem>>, vector<16x128xf32>,
    } else {
    }
    return
  }
  func.func @transform_0(%arg0: i32, %arg1: i32) -> (i32, i32) {
    %c0_i32 = arith.constant 0 : i32
    return %arg0, %arg1 : i32, i32
  }
  func.func @transform_1(%arg0: i32, %arg1: i32) -> (i32, i32) {
    %c0_i32 = arith.constant 0 : i32
    %c0_i32_0 = arith.constant 0 : i32
    %c0_i32_1 = arith.constant 0 : i32
    return %c0_i32, %c0_i32_0 : i32, i32
  }
  func.func @transform_2(%arg0: i32, %arg1: i32) -> (i32, i32) {
    %c0_i32 = arith.constant 0 : i32
    %c0_i32_0 = arith.constant 0 : i32
    %c0_i32_1 = arith.constant 0 : i32
    return %c0_i32, %c0_i32_0 : i32, i32
  }
  func.func @transform_3(%arg0: i32, %arg1: i32) -> (i32, i32) {
    %c0_i32 = arith.constant 0 : i32
    %c0_i32_0 = arith.constant 0 : i32
    return %arg0, %c0_i32 : i32, i32
  }
}

</mosaic_0001>

<llo_original>
// kernel: gcnn_layer.1
$region0: #{gcnn_layer.1}
  #allocation0 [shape = 'u32[]', space=smem, size = 0x4, offset = 0x4, fixed_abs, tag = 'smem constant byte address 0x4 - core index']
  #allocation1 [shape = 'u32[144,128]{1,0:T(1,128)}', space=vmem, size = 0x12000, scoped, tag = 'internal scratch']
  #allocation2 [shape = 'f32[16,128]{1,0:T(8,128)}', space=vmem, size = 0x2000, scoped, tag = 'scratch operand']
  %s0 = inlined_call_operand.vmem [shape: f32[16,16], index: 0, kind: input, shape index: {}]
  %s1 = inlined_call_operand.vmem [shape: bf16[16,128], index: 1, kind: input, shape index: {}]
  %s2 = inlined_call_operand.vmem [shape: f32[1,128], index: 2, kind: input, shape index: {}]
  %s3 = inlined_call_operand.hbm [shape: f32[16,128], index: 3, kind: output, shape index: {}]
  %s4 = sld [smem:[#allocation0]]
  $region30: #{gcnn_layer.1} parent=0
    _
  %s6 = ssub.s32 1, %s4
  %s7 = scalar_select 0, %s6, %s4
  $region1: #{gcnn_layer.1} parent=0
    #allocation3 [shape = 'u8[8192]{0}', space=vmem, size = 0x2000, scoped, tag = 'output window, operand 0, single buffered']
    #allocation4 [shape = 's32[1]{0}', space=sflag, size = 0x4, scoped, tag = 'scoped memory for gcnn_layer.1']
    %8 = vsyncpa [#allocation4], 0
    // Predicated region
    $region2: #{gcnn_layer.1} parent=1 // pred_check
      _
    $region3: #{gcnn_layer.1} parent=1 // pred_check_branch
      %10 = sbr.rel (0) target = $region5
    $region4: #{gcnn_layer.1} parent=1 // pred_region
      _
    $region5: #{gcnn_layer.1} parent=1 // pred_fallthru
      _
    // Predicated region
    $region6: #{gcnn_layer.1} parent=1 // pred_check
      _
    $region7: #{gcnn_layer.1} parent=1 // pred_check_branch
      %12 = sbr.rel (0) target = $region9
    $region8: #{gcnn_layer.1} parent=1 // pred_region
      _
    $region9: #{gcnn_layer.1} parent=1 // pred_fallthru
      _
    // Predicated region
    $region10: #{gcnn_layer.1} parent=1 // pred_check
      _
    $region11: #{gcnn_layer.1} parent=1 // pred_check_branch
      %14 = sbr.rel (0) target = $region13
    $region12: #{gcnn_layer.1} parent=1 // pred_region
      _
    $region13: #{gcnn_layer.1} parent=1 // pred_fallthru
      _
    %p16 = scmp.eq.s32.totalorder 0, 0
    // Predicated region
    $region14: #{gcnn_layer.1} parent=1 // pred_check
      %p17 = pneg %p16
    $region15: #{gcnn_layer.1} parent=1 // pred_check_branch
      %19 = sbr.rel (%p17) target = $region17
    $region16: #{gcnn_layer.1} parent=1 // pred_region
      %20 = vst [vmem:[#allocation2] sm:$0xff] 0.0
      %21 = vst [vmem:[#allocation2 + $0x8] sm:$0xff] 0.0
    $region17: #{gcnn_layer.1} parent=1 // pred_fallthru
      _
    %v22 = vld [vmem:[%s0] sm:$0xff]
    %v23 = vld [vmem:[%s0 + $0x8] sm:$0xff]
    %v24 = vpack.c.bf16 %v23, %v22
    %s25 = smul.u32 0, 16
    %s26 = sshra.s32 %s25, 3
    %s27 = sand.u32 %s25, 7
    %s28 = smul.addr %s26, 4
    %s29 = scalar_lea.vmem %s1, %s28
    %v30 = vld [vmem:[%s29] sm:$0xf]
    %v31 = vld [vmem:[%s29 + $0x4] sm:$0xf]
    %v32 = vld [vmem:[#allocation2] sm:$0xff]
    %v33 = vld [vmem:[#allocation2 + $0x8] sm:$0xff]
    %v36 = vunpack.c.l.b16 %v30
    %v37 = vunpack.c.l.b16 %v31
    %v38 = vpack.c.b16 %v37, %v36
    %vm40 = vcmask 130048
    %v42 = vsel %vm40, %v24, 0
    %44 = vmatprep.subr.bf16.mxu0 0
    %45 = vmatpush1.bf16.msra.mxu0 %v38
    %46 = vmatprep.subr.bf16.mxu0 0
    %47 = vmatpush1.bf16.msra.mxu0 0
    %48 = vmatprep.subr.bf16.mxu0 0
    %49 = vmatpush1.bf16.msra.mxu0 0
    %50 = vmatprep.subr.bf16.mxu0 0
    %51 = vmatpush1.bf16.msra.mxu0 0
    %52 = vmatprep.subr.bf16.mxu0 0
    %53 = vmatpush1.bf16.msra.mxu0 0
    %54 = vmatprep.subr.bf16.mxu0 0
    %55 = vmatpush1.bf16.msra.mxu0 0
    %56 = vmatprep.subr.bf16.mxu0 0
    %57 = vmatpush1.bf16.msra.mxu0 0
    %58 = vmatprep.subr.bf16.mxu0 0
    %59 = vmatpush1.bf16.msra.mxu0 0
    %60 = vmatprep.subr.bf16.mxu0 0
    %61 = vmatpush1.bf16.msra.mxu0 0
    %62 = vmatprep.subr.bf16.mxu0 0
    %63 = vmatpush1.bf16.msra.mxu0 0
    %64 = vmatprep.subr.bf16.mxu0 0
    %65 = vmatpush1.bf16.msra.mxu0 0
    %66 = vmatprep.subr.bf16.mxu0 0
    %67 = vmatpush1.bf16.msra.mxu0 0
    %68 = vmatprep.subr.bf16.mxu0 0
    %69 = vmatpush1.bf16.msra.mxu0 0
    %70 = vmatprep.subr.bf16.mxu0 0
    %71 = vmatpush1.bf16.msra.mxu0 0
    %72 = vmatprep.subr.bf16.mxu0 0
    %73 = vmatpush1.bf16.msra.mxu0 0
    %74 = vmatprep.subr.bf16.mxu0 0
    %75 = vmatpush1.bf16.msra.mxu0 0
    %76 = vmatprep.mubr.bf16.mxu0 0
    %77 = vmatmul.mubr.bf16.gmra.mrb[0].mxu0 %v42
    %v78 = vpop.f32.mrb[0].mxu0
    %v79 = vadd.f32 0.0, %v78
    %v80 = vpop.f32.mrb[0].mxu0
    %v81 = vpop.f32.mrb[0].mxu0
    %v82 = vadd.f32 0.0, %v81
    %v83 = vpop.f32.mrb[0].mxu0
    %84 = vdwg.mxu0
    %v85 = vadd.f32 %v32, %v79
    %v86 = vadd.f32 %v33, %v82
    %87 = vst [vmem:[#allocation2] sm:$0xff] %v85
    %88 = vst [vmem:[#allocation2 + $0x8] sm:$0xff] %v86
    // Predicated region
    $region18: #{gcnn_layer.1} parent=1 // pred_check
      %p89 = pneg %p16
    $region19: #{gcnn_layer.1} parent=1 // pred_check_branch
      %91 = sbr.rel (%p89) target = $region21
    $region20: #{gcnn_layer.1} parent=1 // pred_region
      %v92 = vld [vmem:[#allocation2] sm:$0xff]
      %v93 = vld [vmem:[#allocation2 + $0x8] sm:$0xff]
      %v94 = vld [vmem:[%s2] sm:$0x1]
      %v96 = vlaneseq
      %v97 = vshrl.u32 %v96, 7
      %v98 = vsub.s32 0, %v97
      %v99 = vrot.slane %v94, %v98
      %v101 = vadd.f32 %v92, %v99
      %v102 = vadd.f32 %v93, %v99
      %103 = vst [vmem:[#allocation3] sm:$0xff] %v101
      %104 = vst [vmem:[#allocation3 + $0x8] sm:$0xff] %v102
    $region21: #{gcnn_layer.1} parent=1 // pred_fallthru
      _
    // Predicated region
    $region22: #{gcnn_layer.1} parent=1 // pred_check
      _
    $region23: #{gcnn_layer.1} parent=1 // pred_check_branch
      %106 = sbr.rel (0) target = $region25
    $region24: #{gcnn_layer.1} parent=1 // pred_region
      %s108 = ssub.s32 256, 256
      %109 = vsyncadd [#allocation4], %s108
      %s110 = sshll.u32 [#allocation3], 4
      %s111 = int_to_ptr.vmem [resolvable:$true] %s110
      %116 = dma.vmem_to_hbm [thread:$0]  %s111, 256, %s3, [#allocation4], 128, 128, 8
    $region25: #{gcnn_layer.1} parent=1 // pred_fallthru
      _
    // Predicated region
    $region26: #{gcnn_layer.1} parent=1 // pred_check
      _
    $region27: #{gcnn_layer.1} parent=1 // pred_check_branch
      %118 = sbr.rel (0) target = $region29
    $region28: #{gcnn_layer.1} parent=1 // pred_region
      %119 = dma.done [#allocation4], 256
    $region29: #{gcnn_layer.1} parent=1 // pred_fallthru
      _
    %120 = vsyncpa [#allocation4], 1

</llo_original>
